<compile_context>
chip_gen: v6e
topology: v6e:2x2x1
jax: 0.10.0
libtpu: 0.0.40
codegen_flags: <defaults>
</compile_context>

<pallas_src>
import jax
import jax.numpy as jnp
from jax.experimental import pallas as pl
from jax.experimental.pallas import tpu as pltpu

_PREFERRED_COLS = (1024, 512, 256, 128)  # lane-dense slab widths (no-pad fast path)
_TARGET_BLOCK_BYTES = 6 << 20            # ~6 MiB per block buffer: amortizes per-step
                                         # overhead on v7x's 3.2 TB/s HBM, still
                                         # near-roofline on v5e/v6e.
_VMEM_LIMIT_BYTES = 40 << 20             # in+out double-buffered ~24 MiB + headroom;
                                         # > v5e 16 MiB / v7x 32 MiB scoped defaults,
                                         # < v7x 64 MiB physical VMEM.


def _mish_kernel(x_ref, o_ref):
    x = x_ref[...].astype(jnp.float32)

    # tanh(softplus(x)) = (e^{2x} + 2 e^x) / (e^{2x} + 2 e^x + 2), rewritten
    # in terms of t = exp(-|x|) so neither branch overflows:
    #   x >= 0:  num = 1 + 2t        den = num + 2 t^2
    #   x <  0:  num = t^2 + 2t      den = num + 2
    # den is always in [1, 5] -> reciprocal is well conditioned; limits are
    # correct (y -> x for x >> 0, y -> x * e^x -> 0 for x << 0).
    t = jnp.exp(-jnp.abs(x))
    t2 = t * t
    pos = x >= 0.0
    num = jnp.where(pos, 1.0 + 2.0 * t, t2 + 2.0 * t)
    den = num + jnp.where(pos, 2.0 * t2, 2.0)

    # EUP approx reciprocal + TWO Newton-Raphson steps (VPU-only).  Two steps
    # give full f32 accuracy even from a coarse (~8-bit) seed, fixing the
    # previous 9e-5 mismatch while keeping exp the only heavy transcendental.
    inv = pl.reciprocal(den, approx=True)
    inv = inv * (2.0 - den * inv)
    inv = inv * (2.0 - den * inv)

    o_ref[...] = (x * num * inv).astype(o_ref.dtype)


def _round_up(n: int, m: int) -> int:
    return ((n + m - 1) // m) * m


def mish(x: jax.Array) -> jax.Array:
    """Mish applied elementwise (any shape) via a Pallas TPU kernel."""
    orig_shape = x.shape
    dtype = x.dtype
    total = x.size
    if total == 0:
        return x

    # ---- Lane-dense slab width with a no-copy fast path: pick the widest
    # multiple-of-128 width that divides the element count so we never pad.
    cols = None
    for c in _PREFERRED_COLS:
        if total % c == 0:
            cols = c
            break
    if cols is None:
        # TODO(synk): truly ragged sizes -- mask the tail in-kernel (scalar
        # prefetch of `total`) instead of paying a pad + slice HBM pass.
        cols = _PREFERRED_COLS[0]

    rows = pl.cdiv(total, cols)
    pad = rows * cols - total

    flat = x.reshape(-1)
    if pad:
        flat = jnp.pad(flat, (0, pad))
    x2d = flat.reshape(rows, cols)

    # ---- Block sizing by bytes (constant DMA size across dtypes), with >= 2
    # balanced blocks whenever possible so the parallel axis shards across
    # both v7x TensorCores instead of leaving one idle.
    itemsize = jnp.dtype(dtype).itemsize
    if rows <= 16:
        block_rows = rows                       # tiny input: one full-extent block
    else:
        max_block_rows = max(16, _round_up(_TARGET_BLOCK_BYTES // (cols * itemsize), 16))
        num_blocks = max(2, pl.cdiv(rows, max_block_rows))
        block_rows = min(_round_up(pl.cdiv(rows, num_blocks), 16), rows)
    grid = (pl.cdiv(rows, block_rows),)

    out2d = pl.pallas_call(
        _mish_kernel,
        out_shape=jax.ShapeDtypeStruct((rows, cols), dtype),
        grid=grid,
        in_specs=[pl.BlockSpec((block_rows, cols), lambda i: (i, 0))],
        out_specs=pl.BlockSpec((block_rows, cols), lambda i: (i, 0)),
        compiler_params=pltpu.CompilerParams(
            dimension_semantics=("parallel",),
            vmem_limit_bytes=_VMEM_LIMIT_BYTES,
        ),
    )(x2d)

    out_flat = out2d.reshape(-1)
    if pad:
        out_flat = out_flat[:total]
    return out_flat.reshape(orig_shape)


if __name__ == "__main__":
    key = jax.random.PRNGKey(0)
    x = 3.0 * jax.random.normal(key, (2, 4, 16, 16), dtype=jnp.float32)

    y = mish(x)
    jax.block_until_ready(y)

    # Reference: numerically-stable softplus then tanh (matches torch Mish).
    sp = jnp.maximum(x, 0.0) + jnp.log1p(jnp.exp(-jnp.abs(x)))
    ref = x * jnp.tanh(sp)

    assert y.shape == x.shape and y.dtype == x.dtype
    assert jnp.allclose(y, ref, atol=1e-5, rtol=1e-5), float(
        jnp.max(jnp.abs(y - ref))
    )
    print("KERNEL_OK")
</pallas_src>

<mosaic_0001>
module attributes {stable_mosaic.version = 11 : i64} {
  func.func @_mish_kernel(%arg0: i32, %arg1: memref<2x1024xf32, #tpu.memory_space<vmem>>, %arg2: memref<2x1024xf32, #tpu.memory_space<vmem>>) attributes {dimension_semantics = [#tpu.dimension_semantics<parallel>], iteration_bounds = array<i64: 1>, scalar_prefetch = 0 : i64, scratch_operands = 0 : i64, tpu.core_type = #tpu.core_type<tc>, window_params = [{transform_indices = @transform_0, window_bounds = array<i64: 2, 1024>}, {transform_indices = @transform_1, window_bounds = array<i64: 2, 1024>}]} {
    %c0 = arith.constant 0 : index
    %c0_0 = arith.constant 0 : index
    %0 = vector.load %arg1[%c0, %c0_0] : memref<2x1024xf32, #tpu.memory_space<vmem>>, vector<2x1024xf32>
    %1 = math.absf %0 : vector<2x1024xf32>
    %cst = arith.constant 0.000000e+00 : f32
    %2 = vector.broadcast %cst : f32 to vector<2x1024xf32>
    %3 = arith.subf %2, %1 : vector<2x1024xf32>
    %4 = math.exp %3 : vector<2x1024xf32>
    %5 = arith.mulf %4, %4 : vector<2x1024xf32>
    %cst_1 = arith.constant 0.000000e+00 : f32
    %6 = vector.broadcast %cst_1 : f32 to vector<2x1024xf32>
    %7 = arith.cmpf oge, %0, %6 : vector<2x1024xf32>
    %cst_2 = arith.constant 2.000000e+00 : f32
    %8 = vector.broadcast %cst_2 : f32 to vector<2x1024xf32>
    %9 = arith.mulf %8, %4 : vector<2x1024xf32>
    %cst_3 = arith.constant 1.000000e+00 : f32
    %10 = vector.broadcast %cst_3 : f32 to vector<2x1024xf32>
    %11 = arith.addf %10, %9 : vector<2x1024xf32>
    %cst_4 = arith.constant 2.000000e+00 : f32
    %12 = vector.broadcast %cst_4 : f32 to vector<2x1024xf32>
    %13 = arith.mulf %12, %4 : vector<2x1024xf32>
    %14 = arith.addf %5, %13 : vector<2x1024xf32>
    %15 = arith.select %7, %11, %14 : vector<2x1024xi1>, vector<2x1024xf32>
    %cst_5 = arith.constant 2.000000e+00 : f32
    %16 = vector.broadcast %cst_5 : f32 to vector<2x1024xf32>
    %17 = arith.mulf %16, %5 : vector<2x1024xf32>
    %cst_6 = arith.constant 2.000000e+00 : f32
    %18 = vector.broadcast %cst_6 : f32 to vector<2x1024xf32>
    %19 = arith.select %7, %17, %18 : vector<2x1024xi1>, vector<2x1024xf32>
    %20 = arith.addf %15, %19 : vector<2x1024xf32>
    %21 = tpu.reciprocal %20 {approx = true} : vector<2x1024xf32> -> vector<2x1024xf32>
    %22 = arith.mulf %20, %21 : vector<2x1024xf32>
    %cst_7 = arith.constant 2.000000e+00 : f32
    %23 = vector.broadcast %cst_7 : f32 to vector<2x1024xf32>
    %24 = arith.subf %23, %22 : vector<2x1024xf32>
    %25 = arith.mulf %21, %24 : vector<2x1024xf32>
    %26 = arith.mulf %20, %25 : vector<2x1024xf32>
    %cst_8 = arith.constant 2.000000e+00 : f32
    %27 = vector.broadcast %cst_8 : f32 to vector<2x1024xf32>
    %28 = arith.subf %27, %26 : vector<2x1024xf32>
    %29 = arith.mulf %25, %28 : vector<2x1024xf32>
    %30 = arith.mulf %0, %15 : vector<2x1024xf32>
    %31 = arith.mulf %30, %29 : vector<2x1024xf32>
    %c0_9 = arith.constant 0 : index
    %c0_10 = arith.constant 0 : index
    %32 = vector.load %arg2[%c0_9, %c0_10] : memref<2x1024xf32, #tpu.memory_space<vmem>>, vector<2x1024xf32>
    tpu.vector_store %arg2[%c0_9, %c0_10], %31 {strides = array<i32>} : memref<2x1024xf32, #tpu.memory_space<vmem>>, vector<2x1024xf32>,
    return
  }
  func.func @transform_0(%arg0: i32) -> (i32, i32) {
    %c0_i32 = arith.constant 0 : i32
    %c0_i32_0 = arith.constant 0 : i32
    return %arg0, %c0_i32 : i32, i32
  }
  func.func @transform_1(%arg0: i32) -> (i32, i32) {
    %c0_i32 = arith.constant 0 : i32
    %c0_i32_0 = arith.constant 0 : i32
    return %arg0, %c0_i32 : i32, i32
  }
}

</mosaic_0001>

<llo_original>
// kernel: tpu_custom_call.1
$region0: #{tpu_custom_call.1}
  #allocation0 [shape = 'u32[]', space=smem, size = 0x4, offset = 0x4, fixed_abs, tag = 'smem constant byte address 0x4 - core index']
  #allocation1 [shape = 'u32[144,128]{1,0:T(1,128)}', space=vmem, size = 0x12000, scoped, tag = 'internal scratch']
  %s0 = inlined_call_operand.hbm [shape: f32[2,1024], index: 0, kind: input, shape index: {}]
  %s1 = inlined_call_operand.hbm [shape: f32[2,1024], index: 1, kind: output, shape index: {}]
  %s2 = sld [smem:[#allocation0]]
  $region18: #{tpu_custom_call.1} parent=0
    _
  %s4 = ssub.s32 1, %s2
  %s5 = scalar_select 0, %s4, %s2
  $region1: #{tpu_custom_call.1} parent=0
    #allocation2 [shape = 'u8[8192]{0}', space=vmem, size = 0x2000, scoped, tag = 'input window, operand 0, single buffered']
    #allocation3 [shape = 's32[1]{0}', space=sflag, size = 0x4, scoped, tag = 'scoped memory for tpu_custom_call.1']
    #allocation4 [shape = 's32[1]{0}', space=sflag, size = 0x4, scoped, tag = 'scoped memory for tpu_custom_call.1']
    #allocation5 [shape = 'u8[8192]{0}', space=vmem, size = 0x2000, scoped, tag = 'output window, operand 0, single buffered']
    %6 = vsyncpa [#allocation3], 0
    %7 = vsyncpa [#allocation4], 0
    // Predicated region
    $region2: #{tpu_custom_call.1} parent=1 // pred_check
      _
    $region3: #{tpu_custom_call.1} parent=1 // pred_check_branch
      %9 = sbr.rel (0) target = $region5
    $region4: #{tpu_custom_call.1} parent=1 // pred_region
      %s11 = ssub.s32 256, 256
      %12 = vsyncadd [#allocation3], %s11
      %s14 = sshll.u32 [#allocation2], 4
      %s15 = int_to_ptr.vmem [resolvable:$true] %s14
      %17 = dma.hbm_to_vmem [thread:$0]  %s0, 256, %s15, [#allocation3]
    $region5: #{tpu_custom_call.1} parent=1 // pred_fallthru
      _
    // Predicated region
    $region6: #{tpu_custom_call.1} parent=1 // pred_check
      _
    $region7: #{tpu_custom_call.1} parent=1 // pred_check_branch
      %19 = sbr.rel (0) target = $region9
    $region8: #{tpu_custom_call.1} parent=1 // pred_region
      %20 = dma.done [#allocation3], 256
    $region9: #{tpu_custom_call.1} parent=1 // pred_fallthru
      _
    %v21 = vld [vmem:[#allocation2] sm:$0xff]
    %v22 = vld [vmem:[#allocation2 + $0x8] sm:$0xff]
    %v23 = vand.u32 2147483647, %v21
    %v24 = vand.u32 2147483647, %v22
    %v25 = vsub.f32 0.0, %v23
    %v26 = vsub.f32 0.0, %v24
    %v27 = vmul.f32 %v25, 1.442695
    %v28 = vpow.pop %v27
    %v29 = vmul.f32 %v26, 1.442695
    %v30 = vpow.pop %v29
    %v31 = vmul.f32 %v28, %v28
    %v32 = vmul.f32 %v30, %v30
    %vm33 = vcmp.ge.f32.partialorder %v21, 0.0
    %vm34 = vcmp.ge.f32.partialorder %v22, 0.0
    %v35 = vmul.f32 %v28, 2.0
    %v36 = vmul.f32 %v30, 2.0
    %v37 = vadd.f32 %v35, 1.0
    %v38 = vadd.f32 %v36, 1.0
    %v39 = vadd.f32 %v31, %v35
    %v40 = vadd.f32 %v32, %v36
    %v41 = vsel %vm33, %v37, %v39
    %v42 = vsel %vm34, %v38, %v40
    %v43 = vmul.f32 %v31, 2.0
    %v44 = vmul.f32 %v32, 2.0
    %v45 = vsel %vm33, %v43, 2.0
    %v46 = vsel %vm34, %v44, 2.0
    %v47 = vadd.f32 %v41, %v45
    %v48 = vadd.f32 %v42, %v46
    %v49 = vrcp.pop %v47
    %v50 = vrcp.pop %v48
    %v51 = vmul.f32 %v47, %v49
    %v52 = vmul.f32 %v48, %v50
    %v53 = vsub.f32 2.0, %v51
    %v54 = vsub.f32 2.0, %v52
    %v55 = vmul.f32 %v49, %v53
    %v56 = vmul.f32 %v50, %v54
    %v57 = vmul.f32 %v47, %v55
    %v58 = vmul.f32 %v48, %v56
    %v59 = vsub.f32 2.0, %v57
    %v60 = vsub.f32 2.0, %v58
    %v61 = vmul.f32 %v55, %v59
    %v62 = vmul.f32 %v56, %v60
    %v63 = vmul.f32 %v21, %v41
    %v64 = vmul.f32 %v22, %v42
    %v65 = vmul.f32 %v63, %v61
    %v66 = vmul.f32 %v64, %v62
    %67 = vst [vmem:[#allocation5] sm:$0xff] %v65
    %68 = vst [vmem:[#allocation5 + $0x8] sm:$0xff] %v66
    // Predicated region
    $region10: #{tpu_custom_call.1} parent=1 // pred_check
      _
    $region11: #{tpu_custom_call.1} parent=1 // pred_check_branch
      %70 = sbr.rel (0) target = $region13
    $region12: #{tpu_custom_call.1} parent=1 // pred_region
      %s72 = ssub.s32 256, 256
      %73 = vsyncadd [#allocation4], %s72
      %s75 = sshll.u32 [#allocation5], 4
      %s76 = int_to_ptr.vmem [resolvable:$true] %s75
      %78 = dma.vmem_to_hbm [thread:$0]  %s76, 256, %s1, [#allocation4]
    $region13: #{tpu_custom_call.1} parent=1 // pred_fallthru
      _
    // Predicated region
    $region14: #{tpu_custom_call.1} parent=1 // pred_check
      _
    $region15: #{tpu_custom_call.1} parent=1 // pred_check_branch
      %80 = sbr.rel (0) target = $region17
    $region16: #{tpu_custom_call.1} parent=1 // pred_region
      %81 = dma.done [#allocation4], 256
    $region17: #{tpu_custom_call.1} parent=1 // pred_fallthru
      _
    %82 = vsyncpa [#allocation3], 1
    %83 = vsyncpa [#allocation4], 1

</llo_original>
